<compile_context>
chip_gen: v7x
topology: tpu7x:2x2x1
jax: 0.10.0
libtpu: 0.0.40
codegen_flags: <defaults>
</compile_context>

<pallas_src>
import jax
import jax.numpy as jnp
from jax.experimental import pallas as pl
from jax.experimental.pallas import tpu as pltpu


def _trainer_kernel(s_ref, n_ref, cond_ref, w_ref, x0_ref, eps_ref, out_ref):
    """One grid step: TB images flattened to an (R, HW) tile (R = TB*C).

    s_ref, n_ref, cond_ref : VMEM (R, 1)   per-row signal/noise rate, conditioning
    w_ref                  : VMEM (R, R)   kron(I_TB, W^T) block-diagonal channel mix
    x0_ref, eps_ref        : VMEM (R, HW)  flattened images, HW on the lane axis
    out_ref                : VMEM (1, 1, HW) lane-dense per-block partial sum of sq err
    """
    x0 = x0_ref[...]
    eps = eps_ref[...]
    # q_sample: one fused full-tile VPU pass (per-row scale broadcast over lanes).
    xt = s_ref[...] * x0 + n_ref[...] * eps
    # Synthetic epsilon-theta channel mix on the (otherwise idle) MXU.
    h = jnp.dot(w_ref[...], xt, preferred_element_type=jnp.float32)
    diff = (h + cond_ref[...]) - eps
    # Partial loss reduction in-kernel (sublane reduce rides the XLU slot);
    # the tiny final reduction over blocks/lanes happens in plain JAX.
    out_ref[0] = jnp.sum(diff * diff, axis=0, keepdims=True)


def _choose_tb(B, C, HW, target_bytes=2 << 20):
    """Images per grid step: ~1-2 MiB per input block, sublane-dense rows."""
    per_image = C * HW * 4
    valid = [tb for tb in range(1, B + 1)
             if B % tb == 0 and ((tb * C) % 8 == 0 or tb == B)]
    fitting = [tb for tb in valid if tb * per_image <= target_bytes]
    if fitting:
        # Prefer a grid length >= 2 so v7x can shard over both TensorCores.
        multi = [tb for tb in fitting if B // tb >= 2]
        return max(multi) if multi else max(fitting)
    return min(valid)


def gaussian_diffusion_trainer_loss(
    x0_nchw: jax.Array,
    labels: jax.Array,
    fwd_key: jax.Array,
    *,
    beta=(1e-4, 0.02),
    T: int = 1000,
    num_classes: int = 10,
    compute_reference: bool = False,
):
    """Mirrors GaussianDiffusionTrainer.forward, returning the scalar MSE loss."""
    B, C, H, W = x0_nchw.shape
    HW = H * W

    # ---- buffers registered in __init__ (plain JAX glue) --------------------
    beta_t = jnp.linspace(beta[0], beta[1], T, dtype=jnp.float32)
    alpha_t = 1.0 - beta_t
    alpha_t_bar = jnp.cumprod(alpha_t)
    signal_rate = jnp.sqrt(alpha_t_bar)          # (T,)
    noise_rate = jnp.sqrt(1.0 - alpha_t_bar)     # (T,)

    # ---- deterministic synthetic model parameters ---------------------------
    kp0, kp1, kp2 = jax.random.split(jax.random.PRNGKey(42), 3)
    w_mix = 0.1 * jax.random.normal(kp0, (C, C), jnp.float32)
    bias = jnp.zeros((C,), jnp.float32)
    time_emb_table = 0.05 * jax.random.normal(kp1, (T, C), jnp.float32)
    label_emb_table = 0.05 * jax.random.normal(kp2, (num_classes, C), jnp.float32)

    # ---- random t and epsilon (deterministic via fwd_key) -------------------
    # TODO(synk): epsilon could be generated in-kernel with pltpu.prng_* to
    # roughly halve HBM traffic, but that changes the RNG stream vs jax.random
    # (would break the bit-exact reference check), so it is kept in HBM here.
    k_t, k_eps = jax.random.split(fwd_key)
    t = jax.random.randint(k_t, (B,), 0, T)
    eps_nchw = jax.random.normal(k_eps, x0_nchw.shape, dtype=jnp.float32)

    s_t = signal_rate[t].astype(jnp.float32)     # (B,)
    n_t = noise_rate[t].astype(jnp.float32)      # (B,)
    # Pre-combined conditioning: bias + time_emb[t] + label_emb[labels].
    cond = bias[None, :] + time_emb_table[t] + label_emb_table[labels]   # (B, C)

    # ---- flatten to (B*C, HW): pure views, rows are b-major / c-minor -------
    x0 = x0_nchw.reshape(B * C, HW)
    eps = eps_nchw.reshape(B * C, HW)
    s_rows = jnp.broadcast_to(s_t[:, None], (B, C)).reshape(B * C, 1)
    n_rows = jnp.broadcast_to(n_t[:, None], (B, C)).reshape(B * C, 1)
    cond_rows = cond.reshape(B * C, 1)

    # ---- batch-pack the grid: TB images / step, R = TB*C rows / tile --------
    TB = _choose_tb(B, C, HW)
    R = TB * C
    num_blocks = B // TB
    # Block-diagonal kron(I_TB, W^T) turns the whole packed tile into ONE matmul.
    w_kron = jnp.kron(jnp.eye(TB, dtype=jnp.float32), w_mix.T)   # (R, R)

    block_bytes = R * HW * 4
    # 2 inputs x 2 pipeline buffers + weight + slack; explicit so v5e (16 MiB
    # default scoped) and v7x (64 MiB physical) both behave predictably.
    vmem_limit = int(min(max(5 * block_bytes + (4 << 20), 16 << 20), 100 << 20))

    row_spec = pl.BlockSpec((R, 1), lambda i: (i, 0))
    img_spec = pl.BlockSpec((R, HW), lambda i: (i, 0))

    partials = pl.pallas_call(
        _trainer_kernel,
        out_shape=jax.ShapeDtypeStruct((num_blocks, 1, HW), jnp.float32),
        grid_spec=pltpu.PrefetchScalarGridSpec(
            num_scalar_prefetch=0,
            grid=(num_blocks,),
            in_specs=[
                row_spec,                                   # signal rate per row
                row_spec,                                   # noise rate per row
                row_spec,                                   # conditioning per row
                pl.BlockSpec((R, R), lambda i: (0, 0)),     # kron(I_TB, W^T)
                img_spec,                                   # x0
                img_spec,                                   # eps
            ],
            out_specs=pl.BlockSpec((1, 1, HW), lambda i: (i, 0, 0)),
        ),
        compiler_params=pltpu.CompilerParams(
            dimension_semantics=("parallel",),              # independent blocks
            vmem_limit_bytes=vmem_limit,
        ),
    )(s_rows, n_rows, cond_rows, w_kron, x0, eps)

    total_elems = float(B * C * H * W)
    loss = jnp.sum(partials) / total_elems       # tiny final reduction in JAX

    if not compute_reference:
        return loss

    # ---- pure-JAX reference (debug only: doubles HBM traffic) ---------------
    x0_b = x0_nchw.reshape(B, C, HW)
    eps_b = eps_nchw.reshape(B, C, HW)
    x_t_ref = s_t[:, None, None] * x0_b + n_t[:, None, None] * eps_b
    eps_theta_ref = jnp.einsum("bcp,cd->bdp", x_t_ref, w_mix) + cond[:, :, None]
    loss_ref = jnp.mean((eps_theta_ref - eps_b) ** 2)
    return loss, loss_ref


if __name__ == "__main__":
    B, C, H, W = 2, 4, 16, 16
    T = 1000
    num_classes = 10

    key = jax.random.PRNGKey(0)
    k_x, k_lbl, k_fwd = jax.random.split(key, 3)

    x0 = jax.random.normal(k_x, (B, C, H, W), jnp.float32)
    labels = jax.random.randint(k_lbl, (B,), 0, num_classes)

    loss, loss_ref = gaussian_diffusion_trainer_loss(
        x0, labels, k_fwd, beta=(1e-4, 0.02), T=T, num_classes=num_classes,
        compute_reference=True,
    )
    loss = jax.block_until_ready(loss)

    assert jnp.allclose(loss, loss_ref, rtol=1e-3, atol=1e-3), (loss, loss_ref)
    print("KERNEL_OK")
</pallas_src>

<mosaic_0001>
module attributes {stable_mosaic.version = 11 : i64} {
  func.func @_trainer_kernel(%arg0: i32, %arg1: memref<8x1xf32, #tpu.memory_space<vmem>>, %arg2: memref<8x1xf32, #tpu.memory_space<vmem>>, %arg3: memref<8x1xf32, #tpu.memory_space<vmem>>, %arg4: memref<8x8xf32, #tpu.memory_space<vmem>>, %arg5: memref<8x256xf32, #tpu.memory_space<vmem>>, %arg6: memref<8x256xf32, #tpu.memory_space<vmem>>, %arg7: memref<1x1x256xf32, #tpu.memory_space<vmem>>) attributes {dimension_semantics = [#tpu.dimension_semantics<parallel>], iteration_bounds = array<i64: 1>, scalar_prefetch = 0 : i64, scratch_operands = 0 : i64, tpu.core_type = #tpu.core_type<tc>, window_params = [{transform_indices = @transform_0, window_bounds = array<i64: 8, 1>}, {transform_indices = @transform_1, window_bounds = array<i64: 8, 1>}, {transform_indices = @transform_2, window_bounds = array<i64: 8, 1>}, {pipeline_mode = #tpu.pipeline_mode<synchronous>, transform_indices = @transform_3, window_bounds = array<i64: 8, 8>}, {transform_indices = @transform_4, window_bounds = array<i64: 8, 256>}, {transform_indices = @transform_5, window_bounds = array<i64: 8, 256>}, {transform_indices = @transform_6, window_bounds = array<i64: 1, 1, 256>}]} {
    %c0 = arith.constant 0 : index
    %c0_0 = arith.constant 0 : index
    %0 = vector.load %arg5[%c0, %c0_0] : memref<8x256xf32, #tpu.memory_space<vmem>>, vector<8x256xf32>
    %c0_1 = arith.constant 0 : index
    %c0_2 = arith.constant 0 : index
    %1 = vector.load %arg6[%c0_1, %c0_2] : memref<8x256xf32, #tpu.memory_space<vmem>>, vector<8x256xf32>
    %c0_3 = arith.constant 0 : index
    %c0_4 = arith.constant 0 : index
    %2 = vector.load %arg1[%c0_3, %c0_4] : memref<8x1xf32, #tpu.memory_space<vmem>>, vector<8x1xf32>
    %3 = vector.broadcast %2 : vector<8x1xf32> to vector<8x256xf32>
    %4 = arith.mulf %3, %0 : vector<8x256xf32>
    %c0_5 = arith.constant 0 : index
    %c0_6 = arith.constant 0 : index
    %5 = vector.load %arg2[%c0_5, %c0_6] : memref<8x1xf32, #tpu.memory_space<vmem>>, vector<8x1xf32>
    %6 = vector.broadcast %5 : vector<8x1xf32> to vector<8x256xf32>
    %7 = arith.mulf %6, %1 : vector<8x256xf32>
    %8 = arith.addf %4, %7 : vector<8x256xf32>
    %c0_7 = arith.constant 0 : index
    %c0_8 = arith.constant 0 : index
    %9 = vector.load %arg4[%c0_7, %c0_8] : memref<8x8xf32, #tpu.memory_space<vmem>>, vector<8x8xf32>
    %cst = arith.constant dense<0.000000e+00> : vector<8x256xf32>
    %10 = tpu.matmul %9, %8, %cst {dimension_numbers = #tpu.dot_dimension_numbers<[1], [0], [0], [1], [0, 0, 1, 1], [], []>} : vector<8x8xf32>, vector<8x256xf32>, vector<8x256xf32> -> vector<8x256xf32>
    %c0_9 = arith.constant 0 : index
    %c0_10 = arith.constant 0 : index
    %11 = vector.load %arg3[%c0_9, %c0_10] : memref<8x1xf32, #tpu.memory_space<vmem>>, vector<8x1xf32>
    %12 = vector.broadcast %11 : vector<8x1xf32> to vector<8x256xf32>
    %13 = arith.addf %10, %12 : vector<8x256xf32>
    %14 = arith.subf %13, %1 : vector<8x256xf32>
    %15 = arith.mulf %14, %14 : vector<8x256xf32>
    %cst_11 = arith.constant dense<0.000000e+00> : vector<256xf32>
    %16 = vector.multi_reduction <add>, %15, %cst_11 [0] : vector<8x256xf32> to vector<256xf32>
    %17 = vector.shape_cast %16 : vector<256xf32> to vector<1x256xf32>
    %c0_12 = arith.constant 0 : index
    %c0_13 = arith.constant 0 : index
    %c0_14 = arith.constant 0 : index
    %18 = vector.load %arg7[%c0_12, %c0_13, %c0_14] : memref<1x1x256xf32, #tpu.memory_space<vmem>>, vector<1x1x256xf32>
    %19 = vector.shape_cast %18 : vector<1x1x256xf32> to vector<1x256xf32>
    %20 = vector.shape_cast %17 : vector<1x256xf32> to vector<1x1x256xf32>
    tpu.vector_store %arg7[%c0_12, %c0_13, %c0_14], %20 {strides = array<i32>} : memref<1x1x256xf32, #tpu.memory_space<vmem>>, vector<1x1x256xf32>,
    return
  }
  func.func @transform_0(%arg0: i32) -> (i32, i32) {
    %c0_i32 = arith.constant 0 : i32
    %c0_i32_0 = arith.constant 0 : i32
    return %arg0, %c0_i32 : i32, i32
  }
  func.func @transform_1(%arg0: i32) -> (i32, i32) {
    %c0_i32 = arith.constant 0 : i32
    %c0_i32_0 = arith.constant 0 : i32
    return %arg0, %c0_i32 : i32, i32
  }
  func.func @transform_2(%arg0: i32) -> (i32, i32) {
    %c0_i32 = arith.constant 0 : i32
    %c0_i32_0 = arith.constant 0 : i32
    return %arg0, %c0_i32 : i32, i32
  }
  func.func @transform_3(%arg0: i32) -> (i32, i32) {
    %c0_i32 = arith.constant 0 : i32
    %c0_i32_0 = arith.constant 0 : i32
    %c0_i32_1 = arith.constant 0 : i32
    return %c0_i32, %c0_i32_0 : i32, i32
  }
  func.func @transform_4(%arg0: i32) -> (i32, i32) {
    %c0_i32 = arith.constant 0 : i32
    %c0_i32_0 = arith.constant 0 : i32
    return %arg0, %c0_i32 : i32, i32
  }
  func.func @transform_5(%arg0: i32) -> (i32, i32) {
    %c0_i32 = arith.constant 0 : i32
    %c0_i32_0 = arith.constant 0 : i32
    return %arg0, %c0_i32 : i32, i32
  }
  func.func @transform_6(%arg0: i32) -> (i32, i32, i32) {
    %c0_i32 = arith.constant 0 : i32
    %c0_i32_0 = arith.constant 0 : i32
    %c0_i32_1 = arith.constant 0 : i32
    return %arg0, %c0_i32, %c0_i32_0 : i32, i32, i32
  }
}

</mosaic_0001>

<llo_original>
// kernel: tpu_custom_call.1
$region0: #{tpu_custom_call.1}
  #allocation0 [shape = 'u32[]', space=smem, size = 0x4, offset = 0x4, fixed_abs, tag = 'smem constant byte address 0x4 - core index']
  #allocation1 [shape = 'u32[144,128]{1,0:T(1,128)}', space=vmem, size = 0x12000, scoped, tag = 'internal scratch']
  %s0 = inlined_call_operand.vmem [shape: f32[8,1], index: 0, kind: input, shape index: {}]
  %s1 = inlined_call_operand.vmem [shape: f32[8,1], index: 1, kind: input, shape index: {}]
  %s2 = inlined_call_operand.vmem [shape: f32[8,1], index: 2, kind: input, shape index: {}]
  %s3 = inlined_call_operand.hbm [shape: f32[8,8], index: 3, kind: input, shape index: {}]
  %s4 = inlined_call_operand.vmem [shape: f32[8,256], index: 4, kind: input, shape index: {}]
  %s5 = inlined_call_operand.vmem [shape: f32[8,256], index: 5, kind: input, shape index: {}]
  %s6 = inlined_call_operand.hbm [shape: f32[1,1,256], index: 6, kind: output, shape index: {}]
  %s7 = sld [smem:[#allocation0]]
  $region38: #{tpu_custom_call.1} parent=0
    _
  %s9 = ssub.s32 1, %s7
  %s10 = scalar_select 0, %s9, %s7
  $region1: #{tpu_custom_call.1} parent=0
    #allocation2 [shape = 'u8[4096]{0}', space=vmem, size = 0x1000, scoped, tag = 'input window, operand 3, single buffered']
    #allocation3 [shape = 's32[1]{0}', space=sflag, size = 0x4, scoped, tag = 'scoped memory for tpu_custom_call.1']
    #allocation4 [shape = 's32[1]{0}', space=sflag, size = 0x4, scoped, tag = 'scoped memory for tpu_custom_call.1']
    #allocation5 [shape = 'u8[1024]{0}', space=vmem, size = 0x400, scoped, tag = 'output window, operand 0, single buffered']
    %11 = vsyncpa [#allocation3], 0
    %12 = vsyncpa [#allocation4], 0
    // Predicated region
    $region2: #{tpu_custom_call.1} parent=1 // pred_check
      _
    $region3: #{tpu_custom_call.1} parent=1 // pred_check_branch
      %14 = sbr.rel (0) target = $region5
    $region4: #{tpu_custom_call.1} parent=1 // pred_region
      _
    $region5: #{tpu_custom_call.1} parent=1 // pred_fallthru
      _
    // Predicated region
    $region6: #{tpu_custom_call.1} parent=1 // pred_check
      _
    $region7: #{tpu_custom_call.1} parent=1 // pred_check_branch
      %16 = sbr.rel (0) target = $region9
    $region8: #{tpu_custom_call.1} parent=1 // pred_region
      _
    $region9: #{tpu_custom_call.1} parent=1 // pred_fallthru
      _
    // Predicated region
    $region10: #{tpu_custom_call.1} parent=1 // pred_check
      _
    $region11: #{tpu_custom_call.1} parent=1 // pred_check_branch
      %18 = sbr.rel (0) target = $region13
    $region12: #{tpu_custom_call.1} parent=1 // pred_region
      _
    $region13: #{tpu_custom_call.1} parent=1 // pred_fallthru
      _
    // Predicated region
    $region14: #{tpu_custom_call.1} parent=1 // pred_check
      _
    $region15: #{tpu_custom_call.1} parent=1 // pred_check_branch
      %20 = sbr.rel (0) target = $region17
    $region16: #{tpu_custom_call.1} parent=1 // pred_region
      %s22 = ssub.s32 128, 128
      %23 = vsyncadd [#allocation3], %s22
      %s25 = sshll.u32 [#allocation2], 4
      %s26 = int_to_ptr.vmem [resolvable:$true] %s25
      %28 = dma.hbm_to_vmem [thread:$0]  %s3, 128, %s26, [#allocation3]
    $region17: #{tpu_custom_call.1} parent=1 // pred_fallthru
      _
    // Predicated region
    $region18: #{tpu_custom_call.1} parent=1 // pred_check
      _
    $region19: #{tpu_custom_call.1} parent=1 // pred_check_branch
      %30 = sbr.rel (0) target = $region21
    $region20: #{tpu_custom_call.1} parent=1 // pred_region
      _
    $region21: #{tpu_custom_call.1} parent=1 // pred_fallthru
      _
    // Predicated region
    $region22: #{tpu_custom_call.1} parent=1 // pred_check
      _
    $region23: #{tpu_custom_call.1} parent=1 // pred_check_branch
      %32 = sbr.rel (0) target = $region25
    $region24: #{tpu_custom_call.1} parent=1 // pred_region
      _
    $region25: #{tpu_custom_call.1} parent=1 // pred_fallthru
      _
    // Predicated region
    $region26: #{tpu_custom_call.1} parent=1 // pred_check
      _
    $region27: #{tpu_custom_call.1} parent=1 // pred_check_branch
      %34 = sbr.rel (0) target = $region29
    $region28: #{tpu_custom_call.1} parent=1 // pred_region
      %35 = dma.done [#allocation3], 128
    $region29: #{tpu_custom_call.1} parent=1 // pred_fallthru
      _
    %v36 = vld [vmem:[%s4] sm:$0xff]
    %v37 = vld [vmem:[%s4 + $0x8] sm:$0xff]
    %v38 = vld [vmem:[%s5] sm:$0xff]
    %v39 = vld [vmem:[%s5 + $0x8] sm:$0xff]
    %v40 = vld [vmem:[%s0] sm:$0xff]
    %42 = vset.pattern.permute.xlu0 0
    %43 = vperm.xlu0 %42, %v40
    %v44 = vpop.permute.xlu0 %43
    %v46 = vmul.f32 %v44, %v36
    %v47 = vmul.f32 %v44, %v37
    %v48 = vld [vmem:[%s1] sm:$0xff]
    %50 = vset.pattern.permute.xlu0 0
    %51 = vperm.xlu0 %50, %v48
    %v52 = vpop.permute.xlu0 %51
    %v54 = vmul.f32 %v52, %v38
    %v55 = vmul.f32 %v52, %v39
    %v56 = vadd.f32 %v46, %v54
    %v57 = vadd.f32 %v47, %v55
    %v58 = vld [vmem:[#allocation2] sm:$0xff]
    %v59 = vld [vmem:[%s2] sm:$0xff]
    %61 = vset.pattern.permute.xlu0 0
    %62 = vperm.xlu0 %61, %v59
    %v63 = vpop.permute.xlu0 %62
    %vm65 = vcmask 64512
    %v67 = vsel %vm65, %v58, 0
    %69 = vmatprep.subr.mxu0 %v57
    %70 = vmatpush1.msra.mxu0 %v56
    %71 = vmatprep.subr.mxu0 0.0
    %72 = vmatpush1.msra.mxu0 0.0
    %73 = vmatprep.subr.mxu0 0.0
    %74 = vmatpush1.msra.mxu0 0.0
    %75 = vmatprep.subr.mxu0 0.0
    %76 = vmatpush1.msra.mxu0 0.0
    %77 = vmatprep.subr.mxu0 0.0
    %78 = vmatpush1.msra.mxu0 0.0
    %79 = vmatprep.subr.mxu0 0.0
    %80 = vmatpush1.msra.mxu0 0.0
    %81 = vmatprep.subr.mxu0 0.0
    %82 = vmatpush1.msra.mxu0 0.0
    %83 = vmatprep.subr.mxu0 0.0
    %84 = vmatpush1.msra.mxu0 0.0
    %85 = vmatprep.subr.mxu0 0.0
    %86 = vmatpush1.msra.mxu0 0.0
    %87 = vmatprep.subr.mxu0 0.0
    %88 = vmatpush1.msra.mxu0 0.0
    %89 = vmatprep.subr.mxu0 0.0
    %90 = vmatpush1.msra.mxu0 0.0
    %91 = vmatprep.subr.mxu0 0.0
    %92 = vmatpush1.msra.mxu0 0.0
    %93 = vmatprep.subr.mxu0 0.0
    %94 = vmatpush1.msra.mxu0 0.0
    %95 = vmatprep.subr.mxu0 0.0
    %96 = vmatpush1.msra.mxu0 0.0
    %97 = vmatprep.subr.mxu0 0.0
    %98 = vmatpush1.msra.mxu0 0.0
    %99 = vmatprep.subr.mxu0 0.0
    %100 = vmatpush1.msra.mxu0 0.0
    %101 = vmatprep.subr.mxu0 0.0
    %102 = vmatpush1.msra.mxu0 0.0
    %103 = vmatprep.subr.mxu0 0.0
    %104 = vmatpush1.msra.mxu0 0.0
    %105 = vmatprep.subr.mxu0 0.0
    %106 = vmatpush1.msra.mxu0 0.0
    %107 = vmatprep.subr.mxu0 0.0
    %108 = vmatpush1.msra.mxu0 0.0
    %109 = vmatprep.subr.mxu0 0.0
    %110 = vmatpush1.msra.mxu0 0.0
    %111 = vmatprep.subr.mxu0 0.0
    %112 = vmatpush1.msra.mxu0 0.0
    %113 = vmatprep.subr.mxu0 0.0
    %114 = vmatpush1.msra.mxu0 0.0
    %115 = vmatprep.subr.mxu0 0.0
    %116 = vmatpush1.msra.mxu0 0.0
    %117 = vmatprep.subr.mxu0 0.0
    %118 = vmatpush1.msra.mxu0 0.0
    %119 = vmatprep.subr.mxu0 0.0
    %120 = vmatpush1.msra.mxu0 0.0
    %121 = vmatprep.subr.mxu0 0.0
    %122 = vmatpush1.msra.mxu0 0.0
    %123 = vmatprep.subr.mxu0 0.0
    %124 = vmatpush1.msra.mxu0 0.0
    %125 = vmatprep.subr.mxu0 0.0
    %126 = vmatpush1.msra.mxu0 0.0
    %127 = vmatprep.subr.mxu0 0.0
    %128 = vmatpush1.msra.mxu0 0.0
    %129 = vmatprep.subr.mxu0 0.0
    %130 = vmatpush1.msra.mxu0 0.0
    %131 = vmatprep.subr.mxu0 0.0
    %132 = vmatpush1.msra.mxu0 0.0
    %133 = vmatprep.mubr.f32.mxu0 0.0
    %134 = vmatmul.mubr.f32.gmra.mrb[0].mxu0 %v67
    %v135 = vpop.f32.mrb[0].mxu0
    %v136 = vadd.f32 %v63, %v135
    %v137 = vpop.f32.mrb[0].mxu0
    %v138 = vadd.f32 %v63, %v137
    %139 = vdwg.mxu0
    %v140 = vsub.f32 %v136, %v38
    %v141 = vsub.f32 %v138, %v39
    %v142 = vmul.f32 %v140, %v140
    %v143 = vmul.f32 %v141, %v141
    %v144 = vrot.slane %v142, 4
    %v145 = vadd.f32 %v142, %v144
    %v146 = vrot.slane %v145, 2
    %v147 = vadd.f32 %v145, %v146
    %v148 = vrot.slane %v147, 1
    %v149 = vadd.f32 %v147, %v148
    %v150 = vrot.slane %v143, 4
    %v151 = vadd.f32 %v143, %v150
    %v152 = vrot.slane %v151, 2
    %v153 = vadd.f32 %v151, %v152
    %v154 = vrot.slane %v153, 1
    %v155 = vadd.f32 %v153, %v154
    %v158 = vcombine.low %v149, %v155
    %v160 = vunpack.c.l.s4 1966171168
    %v161 = vunpack.c.0.s8 %v160
    %v162 = vlaneseq
    %v163 = vshrl.u32 %v162, 7
    %v164 = vsub.s32 %v161, %v163
    %v165 = vrot.slane %v158, %v164
    %v167 = vunpack.c.l.s4 1966171168
    %v168 = vunpack.c.0.s8 %v167
    %v169 = vlaneseq
    %v170 = vshrl.u32 %v169, 7
    %v171 = vsub.s32 %v168, %v170
    %v172 = vrot.slane %v165, %v171
    %v174 = vlaneseq
    %vm175 = vcmp.ge.s32.totalorder %v174, 0
    %vm176 = vcmp.lt.s32.totalorder %v174, 256
    %vm177 = vmand %vm175, %vm176
    %178 = vst.msk [vmem:[#allocation5] sm:$0x3] %vm177, %v172
    // Predicated region
    $region30: #{tpu_custom_call.1} parent=1 // pred_check
      _
    $region31: #{tpu_custom_call.1} parent=1 // pred_check_branch
      %180 = sbr.rel (0) target = $region33
    $region32: #{tpu_custom_call.1} parent=1 // pred_region
      %s182 = ssub.s32 32, 32
      %183 = vsyncadd [#allocation4], %s182
      %s185 = sshll.u32 [#allocation5], 4
      %s186 = int_to_ptr.vmem [resolvable:$true] %s185
      %188 = dma.vmem_to_hbm [thread:$0]  %s186, 32, %s6, [#allocation4]
    $region33: #{tpu_custom_call.1} parent=1 // pred_fallthru
      _
    // Predicated region
    $region34: #{tpu_custom_call.1} parent=1 // pred_check
      _
    $region35: #{tpu_custom_call.1} parent=1 // pred_check_branch
      %190 = sbr.rel (0) target = $region37
    $region36: #{tpu_custom_call.1} parent=1 // pred_region
      %191 = dma.done [#allocation4], 32
    $region37: #{tpu_custom_call.1} parent=1 // pred_fallthru
      _
    %192 = vsyncpa [#allocation3], 1
    %193 = vsyncpa [#allocation4], 1

</llo_original>
